<compile_context>
chip_gen: v6e
topology: v6e:2x2x1
jax: 0.10.0
libtpu: 0.0.40
codegen_flags: <defaults>
</compile_context>

<pallas_src>
import math
from functools import partial

import jax
import jax.numpy as jnp
from jax.experimental import pallas as pl
from jax.experimental.pallas import tpu as pltpu


def _round_up(a: int, b: int) -> int:
    return (a + b - 1) // b * b


def _gated_ffn_kernel(x_ref, w13_ref, wo_ref, out_ref, *, hidden):
    x = x_ref[...]                                                   # (TM, dim)

    # Single fused dot for the gate + value projections: (TM, 2*hidden).
    h = jnp.dot(x, w13_ref[...], preferred_element_type=jnp.float32)

    # hidden is a multiple of 256 -> lane-aligned, zero-cost slices.
    gate = jax.nn.gelu(h[:, :hidden], approximate=True)              # gelu_tanh
    g = gate * h[:, hidden:]                                         # (TM, hidden)

    out_ref[...] = jnp.dot(
        g.astype(wo_ref.dtype), wo_ref[...],
        preferred_element_type=jnp.float32,
    ).astype(out_ref.dtype)


def gated_ffn(x, w1, w3, wo, *, tm=None):
    """GatedFFN forward.

    x  : (..., dim)
    w1 : (dim, hidden)   -- already transposed vs. torch nn.Linear storage
    w3 : (dim, hidden)
    wo : (hidden, dim)
    """
    orig_shape = x.shape
    dim = orig_shape[-1]
    hidden = w1.shape[1]
    assert w1.shape == (dim, hidden) and w3.shape == (dim, hidden)
    assert wo.shape == (hidden, dim)

    x2 = x.reshape(-1, dim).astype(jnp.float32)
    M = x2.shape[0]

    # NOTE: in real use this concat (and any dtype cast) would be done once at
    # parameter-load time, not per call.
    w13 = jnp.concatenate([w1, w3], axis=1).astype(jnp.float32)      # (dim, 2*hidden)
    wo = wo.astype(jnp.float32)

    # Row-tile size: multiple of 8, capped so per-block activations stay small.
    if tm is None:
        tm = min(256, _round_up(M, 8))
    tm = max(8, _round_up(tm, 8))

    # Pad M so the grid tiles it exactly.
    M_pad = _round_up(M, tm)
    if M_pad != M:
        x2 = jnp.pad(x2, ((0, M_pad - M), (0, 0)))

    grid = (M_pad // tm,)

    out = pl.pallas_call(
        partial(_gated_ffn_kernel, hidden=hidden),
        out_shape=jax.ShapeDtypeStruct((M_pad, dim), jnp.float32),
        grid_spec=pltpu.PrefetchScalarGridSpec(
            num_scalar_prefetch=0,
            grid=grid,
            in_specs=[
                pl.BlockSpec((tm, dim), lambda i: (i, 0)),           # x rows (pipelined)
                pl.BlockSpec((dim, 2 * hidden), lambda i: (0, 0)),   # fused W1|W3 (resident)
                pl.BlockSpec((hidden, dim), lambda i: (0, 0)),       # Wo (resident)
            ],
            out_specs=pl.BlockSpec((tm, dim), lambda i: (i, 0)),
        ),
        compiler_params=pltpu.CompilerParams(
            # Rows are independent -> shard grid across v7x's 2 TensorCores.
            dimension_semantics=("parallel",),
        ),
    )(x2, w13, wo)

    if M_pad != M:
        out = out[:M]
    return out.reshape(orig_shape)


def _reference(x, w1, w3, wo):
    """Pure-JAX reference matching the PyTorch module in eval mode."""
    h = jax.nn.gelu(x @ w1, approximate=True) * (x @ w3)
    return h @ wo


if __name__ == "__main__":
    # Module config: dim=128, hidden_dim=128, multiple_of=256
    #   -> int(2*128/3) = 85 -> rounded up to hidden = 256.
    B, S, dim = 2, 8, 128
    hidden_dim_arg, multiple_of = 128, 256
    hidden = int(2 * hidden_dim_arg / 3)
    hidden = multiple_of * ((hidden + multiple_of - 1) // multiple_of)   # 256

    key = jax.random.PRNGKey(0)
    k_x, k_w1, k_w3, k_wo = jax.random.split(key, 4)

    x = jax.random.normal(k_x, (B, S, dim), dtype=jnp.float32)
    # Weights stored as (in, out), i.e. already transposed w.r.t. torch's
    # nn.Linear (out, in) storage; scaled so activations stay O(1).
    w1 = jax.random.normal(k_w1, (dim, hidden), dtype=jnp.float32) / math.sqrt(dim)
    w3 = jax.random.normal(k_w3, (dim, hidden), dtype=jnp.float32) / math.sqrt(dim)
    wo = jax.random.normal(k_wo, (hidden, dim), dtype=jnp.float32) / math.sqrt(hidden)

    # tm=8 -> grid=(2,) at these small shapes (exercises the pipelined row grid).
    out = gated_ffn(x, w1, w3, wo, tm=8)
    out = jax.block_until_ready(out)

    ref = _reference(x, w1, w3, wo)
    assert out.shape == (B, S, dim)
    assert jnp.allclose(out, ref, atol=1e-3, rtol=1e-3), "mismatch vs pure-JAX reference"

    print("KERNEL_OK")
</pallas_src>

<mosaic_0001>
module attributes {stable_mosaic.version = 11 : i64} {
  func.func @_gated_ffn_kernel(%arg0: i32, %arg1: memref<8x128xf32, #tpu.memory_space<vmem>>, %arg2: memref<128x512xf32, #tpu.memory_space<vmem>>, %arg3: memref<256x128xf32, #tpu.memory_space<vmem>>, %arg4: memref<8x128xf32, #tpu.memory_space<vmem>>) attributes {dimension_semantics = [#tpu.dimension_semantics<parallel>], iteration_bounds = array<i64: 2>, scalar_prefetch = 0 : i64, scratch_operands = 0 : i64, tpu.core_type = #tpu.core_type<tc>, window_params = [{transform_indices = @transform_0, window_bounds = array<i64: 8, 128>}, {pipeline_mode = #tpu.pipeline_mode<synchronous>, transform_indices = @transform_1, window_bounds = array<i64: 128, 512>}, {pipeline_mode = #tpu.pipeline_mode<synchronous>, transform_indices = @transform_2, window_bounds = array<i64: 256, 128>}, {transform_indices = @transform_3, window_bounds = array<i64: 8, 128>}]} {
    %c0 = arith.constant 0 : index
    %c0_0 = arith.constant 0 : index
    %0 = vector.load %arg1[%c0, %c0_0] : memref<8x128xf32, #tpu.memory_space<vmem>>, vector<8x128xf32>
    %c0_1 = arith.constant 0 : index
    %c0_2 = arith.constant 0 : index
    %1 = vector.load %arg2[%c0_1, %c0_2] : memref<128x512xf32, #tpu.memory_space<vmem>>, vector<128x512xf32>
    %cst = arith.constant dense<0.000000e+00> : vector<8x512xf32>
    %2 = tpu.matmul %0, %1, %cst {dimension_numbers = #tpu.dot_dimension_numbers<[1], [0], [0], [1], [0, 0, 1, 1], [], []>} : vector<8x128xf32>, vector<128x512xf32>, vector<8x512xf32> -> vector<8x512xf32>
    %3 = vector.extract_strided_slice %2 {offsets = [0, 0], sizes = [8, 256], strides = [1, 1]} : vector<8x512xf32> to vector<8x256xf32>
    %4 = arith.mulf %3, %3 : vector<8x256xf32>
    %5 = arith.mulf %3, %4 : vector<8x256xf32>
    %cst_3 = arith.constant 4.471500e-02 : f32
    %6 = vector.broadcast %cst_3 : f32 to vector<8x256xf32>
    %7 = arith.mulf %6, %5 : vector<8x256xf32>
    %8 = arith.addf %3, %7 : vector<8x256xf32>
    %cst_4 = arith.constant 0.797884583 : f32
    %9 = vector.broadcast %cst_4 : f32 to vector<8x256xf32>
    %10 = arith.mulf %9, %8 : vector<8x256xf32>
    %11 = math.tanh %10 : vector<8x256xf32>
    %cst_5 = arith.constant 1.000000e+00 : f32
    %12 = vector.broadcast %cst_5 : f32 to vector<8x256xf32>
    %13 = arith.addf %12, %11 : vector<8x256xf32>
    %cst_6 = arith.constant 5.000000e-01 : f32
    %14 = vector.broadcast %cst_6 : f32 to vector<8x256xf32>
    %15 = arith.mulf %14, %13 : vector<8x256xf32>
    %16 = arith.mulf %3, %15 : vector<8x256xf32>
    %17 = vector.extract_strided_slice %2 {offsets = [0, 256], sizes = [8, 256], strides = [1, 1]} : vector<8x512xf32> to vector<8x256xf32>
    %18 = arith.mulf %16, %17 : vector<8x256xf32>
    %c0_7 = arith.constant 0 : index
    %c0_8 = arith.constant 0 : index
    %19 = vector.load %arg3[%c0_7, %c0_8] : memref<256x128xf32, #tpu.memory_space<vmem>>, vector<256x128xf32>
    %cst_9 = arith.constant dense<0.000000e+00> : vector<8x128xf32>
    %20 = tpu.matmul %18, %19, %cst_9 {dimension_numbers = #tpu.dot_dimension_numbers<[1], [0], [0], [1], [0, 0, 1, 1], [], []>} : vector<8x256xf32>, vector<256x128xf32>, vector<8x128xf32> -> vector<8x128xf32>
    %c0_10 = arith.constant 0 : index
    %c0_11 = arith.constant 0 : index
    %21 = vector.load %arg4[%c0_10, %c0_11] : memref<8x128xf32, #tpu.memory_space<vmem>>, vector<8x128xf32>
    tpu.vector_store %arg4[%c0_10, %c0_11], %20 {strides = array<i32>} : memref<8x128xf32, #tpu.memory_space<vmem>>, vector<8x128xf32>,
    return
  }
  func.func @transform_0(%arg0: i32) -> (i32, i32) {
    %c0_i32 = arith.constant 0 : i32
    %c0_i32_0 = arith.constant 0 : i32
    return %arg0, %c0_i32 : i32, i32
  }
  func.func @transform_1(%arg0: i32) -> (i32, i32) {
    %c0_i32 = arith.constant 0 : i32
    %c0_i32_0 = arith.constant 0 : i32
    %c0_i32_1 = arith.constant 0 : i32
    return %c0_i32, %c0_i32_0 : i32, i32
  }
  func.func @transform_2(%arg0: i32) -> (i32, i32) {
    %c0_i32 = arith.constant 0 : i32
    %c0_i32_0 = arith.constant 0 : i32
    %c0_i32_1 = arith.constant 0 : i32
    return %c0_i32, %c0_i32_0 : i32, i32
  }
  func.func @transform_3(%arg0: i32) -> (i32, i32) {
    %c0_i32 = arith.constant 0 : i32
    %c0_i32_0 = arith.constant 0 : i32
    return %arg0, %c0_i32 : i32, i32
  }
}

</mosaic_0001>

<llo_original>
// kernel: tpu_custom_call.1
$region0: #{tpu_custom_call.1}
  #allocation0 [shape = 'u32[]', space=smem, size = 0x4, offset = 0x4, fixed_abs, tag = 'smem constant byte address 0x4 - core index']
  #allocation1 [shape = 'u32[144,128]{1,0:T(1,128)}', space=vmem, size = 0x12000, scoped, tag = 'internal scratch']
  %s0 = inlined_call_operand.hbm [shape: f32[16,128], index: 0, kind: input, shape index: {}]
  %s1 = inlined_call_operand.hbm [shape: f32[128,512], index: 1, kind: input, shape index: {}]
  %s2 = inlined_call_operand.hbm [shape: f32[256,128], index: 2, kind: input, shape index: {}]
  %s3 = inlined_call_operand.hbm [shape: f32[16,128], index: 3, kind: output, shape index: {}]
  %s4 = sld [smem:[#allocation0]]
  $region57: #{tpu_custom_call.1} parent=0
    _
  %s6 = ssub.s32 1, %s4
  %s7 = scalar_select 0, %s6, %s4
  $region1: #{tpu_custom_call.1} parent=0
    #allocation2 [shape = 'u8[8192]{0}', space=vmem, size = 0x2000, scoped, tag = 'input window, operand 0']
    #allocation3 [shape = 's32[2]{0}', space=sflag, size = 0x8, scoped, tag = 'scoped memory for tpu_custom_call.1']
    #allocation4 [shape = 's32[2]{0}', space=sflag, size = 0x8, scoped, tag = 'scoped memory for tpu_custom_call.1']
    #allocation5 [shape = 'u8[262144]{0}', space=vmem, size = 0x40000, scoped, tag = 'input window, operand 1, single buffered']
    #allocation6 [shape = 's32[1]{0}', space=sflag, size = 0x4, scoped, tag = 'scoped memory for tpu_custom_call.1']
    #allocation7 [shape = 'u8[131072]{0}', space=vmem, size = 0x20000, scoped, tag = 'input window, operand 2, single buffered']
    #allocation8 [shape = 'u8[8192]{0}', space=vmem, size = 0x2000, scoped, tag = 'output window, operand 0']
    %8 = vsyncpa [#allocation3], 0
    %s9 = scalar_lea.sflag [#allocation3], 1
    %10 = vsyncpa %s9, 0
    %11 = vsyncpa [#allocation6], 0
    %12 = vsyncpa [#allocation4], 0
    %s13 = scalar_lea.sflag [#allocation4], 1
    %14 = vsyncpa %s13, 0
    loop: start=0, step=1, limit=4
    $region2: #{tpu_custom_call.1} parent=1 // loop_pre_header
      _
    $region3: #{tpu_custom_call.1} parent=1 // loop_header
      %s16 = sphi 0, %s20
      %p17 = scmp.ge.s32.totalorder %s16, 4
      %s26 = sphi 0, %s28
      %s29 = sphi 0, %s26
      %s30 = sphi 0, %s29
      %s46 = sphi 0, %s30
      %s50 = sphi 0, %s50
      %s52 = sphi 0, %s50
      %s53 = sphi 0, %s52
      %s67 = sphi 0, %s53
      %s71 = sphi 0, %s71
      %s73 = sphi 0, %s71
      %s74 = sphi 0, %s73
      %s88 = sphi 0, %s74
      %s94 = sphi 0, %s96
      %s97 = sphi 0, %s94
      %s98 = sphi 0, %s97
      %s114 = sphi 0, %s98
    $region4: #{tpu_custom_call.1} parent=1 // loop_header_branch
      %19 = sbr.rel (%p17) target = $region8
    $region5: #{tpu_custom_call.1} parent=1 // loop_body
      %s21 = ssub.s32 %s16, 1
      %s22 = ssub.s32 %s16, 2
      %s23 = sadd.s32 %s16, 1
      %s24 = ssub.s32 %s16, %s23
      %p25 = scmp.eq.s32.totalorder %s24, 0
      %s27 = sadd.s32 %s26, 1
      %s28 = scalar_select %p25, %s26, %s27
      %p31 = pneg %p25
      %p32 = scmp.eq.s32.totalorder %s16, 1
      %p33 = por %p31, %p32
      %p34 = scmp.ne.s32.totalorder %s26, %s29
      %p35 = scmp.eq.s32.totalorder %s16, 0
      %p36 = por %p34, %p35
      %p37 = scmp.ne.s32.totalorder %s26, %s29
      %p38 = scmp.eq.s32.totalorder %s21, 1
      %p39 = por %p37, %p38
      %p40 = scmp.ne.s32.totalorder %s29, %s30
      %p41 = scmp.eq.s32.totalorder %s21, 0
      %p42 = por %p40, %p41
      %p43 = scmp.ne.s32.totalorder %s29, %s30
      %p44 = scmp.eq.s32.totalorder %s22, 1
      %p45 = por %p43, %p44
      %p47 = scmp.ne.s32.totalorder %s30, %s46
      %p48 = scmp.eq.s32.totalorder %s22, 0
      %p49 = por %p47, %p48
      %s51 = sadd.s32 %s50, 1
      %p54 = scmp.eq.s32.totalorder %s16, 1
      %p55 = scmp.ne.s32.totalorder %s50, %s52
      %p56 = scmp.eq.s32.totalorder %s16, 0
      %p57 = por %p55, %p56
      %p58 = scmp.ne.s32.totalorder %s50, %s52
      %p59 = scmp.eq.s32.totalorder %s21, 1
      %p60 = por %p58, %p59
      %p61 = scmp.ne.s32.totalorder %s52, %s53
      %p62 = scmp.eq.s32.totalorder %s21, 0
      %p63 = por %p61, %p62
      %p64 = scmp.ne.s32.totalorder %s52, %s53
      %p65 = scmp.eq.s32.totalorder %s22, 1
      %p66 = por %p64, %p65
      %p68 = scmp.ne.s32.totalorder %s53, %s67
      %p69 = scmp.eq.s32.totalorder %s22, 0
      %p70 = por %p68, %p69
      %s72 = sadd.s32 %s71, 1
      %p75 = scmp.eq.s32.totalorder %s16, 1
      %p76 = scmp.ne.s32.totalorder %s71, %s73
      %p77 = scmp.eq.s32.totalorder %s16, 0
      %p78 = por %p76, %p77
      %p79 = scmp.ne.s32.totalorder %s71, %s73
      %p80 = scmp.eq.s32.totalorder %s21, 1
      %p81 = por %p79, %p80
      %p82 = scmp.ne.s32.totalorder %s73, %s74
      %p83 = scmp.eq.s32.totalorder %s21, 0
      %p84 = por %p82, %p83
      %p85 = scmp.ne.s32.totalorder %s73, %s74
      %p86 = scmp.eq.s32.totalorder %s22, 1
      %p87 = por %p85, %p86
      %p89 = scmp.ne.s32.totalorder %s74, %s88
      %p90 = scmp.eq.s32.totalorder %s22, 0
      %p91 = por %p89, %p90
      %s92 = ssub.s32 %s16, %s23
      %p93 = scmp.eq.s32.totalorder %s92, 0
      %s95 = sadd.s32 %s94, 1
      %s96 = scalar_select %p93, %s94, %s95
      %p99 = pneg %p93
      %p100 = scmp.eq.s32.totalorder %s16, 1
      %p101 = por %p99, %p100
      %p102 = scmp.ne.s32.totalorder %s94, %s97
      %p103 = scmp.eq.s32.totalorder %s16, 0
      %p104 = por %p102, %p103
      %p105 = scmp.ne.s32.totalorder %s94, %s97
      %p106 = scmp.eq.s32.totalorder %s21, 1
      %p107 = por %p105, %p106
      %p108 = scmp.ne.s32.totalorder %s97, %s98
      %p109 = scmp.eq.s32.totalorder %s21, 0
      %p110 = por %p108, %p109
      %p111 = scmp.ne.s32.totalorder %s97, %s98
      %p112 = scmp.eq.s32.totalorder %s22, 1
      %p113 = por %p111, %p112
      %p115 = scmp.ne.s32.totalorder %s98, %s114
      %p116 = scmp.eq.s32.totalorder %s22, 0
      %p117 = por %p115, %p116
      %p118 = scmp.le.s32.totalorder 1, %s16
      %p119 = scmp.lt.s32.totalorder %s16, 3
      %p120 = pnand %p118, %p119
      %p121 = pneg %p120
      // Predicated region
      $region9: #{tpu_custom_call.1} parent=5 // pred_check
        _
      $region10: #{tpu_custom_call.1} parent=5 // pred_check_branch
        %123 = sbr.rel (%p120) target = $region12
      $region11: #{tpu_custom_call.1} parent=5 // pred_region
        %s124 = ssub.s32 %s16, 1
        // Predicated region
        $region13: #{tpu_custom_call.1} parent=11 // pred_check
          %p125 = pneg %p63
        $region14: #{tpu_custom_call.1} parent=11 // pred_check_branch
          %127 = sbr.rel (%p125) target = $region16
        $region15: #{tpu_custom_call.1} parent=11 // pred_region
          %s129 = ssub.s32 8192, 8192
          %130 = vsyncadd [#allocation6], %s129
          %s131 = sshll.u32 [#allocation5], 4
          %s132 = int_to_ptr.vmem [resolvable:$true] %s131
          %137 = dma.hbm_to_vmem [thread:$0]  %s1, 8192, %s132, [#allocation6], 512, 512, 32
        $region16: #{tpu_custom_call.1} parent=11 // pred_fallthru
          _
        // Predicated region
        $region17: #{tpu_custom_call.1} parent=11 // pred_check
          %p138 = pneg %p84
        $region18: #{tpu_custom_call.1} parent=11 // pred_check_branch
          %140 = sbr.rel (%p138) target = $region20
        $region19: #{tpu_custom_call.1} parent=11 // pred_region
          %s142 = ssub.s32 4096, 4096
          %143 = vsyncadd [#allocation6], %s142
          %s144 = sshll.u32 [#allocation7], 4
          %s145 = int_to_ptr.vmem [resolvable:$true] %s144
          %150 = dma.hbm_to_vmem [thread:$0]  %s2, 4096, %s145, [#allocation6], 128, 128, 8
        $region20: #{tpu_custom_call.1} parent=11 // pred_fallthru
          _
      $region12: #{tpu_custom_call.1} parent=5 // pred_fallthru
        _
      %p151 = scmp.lt.s32.totalorder %s16, 2
      // Predicated region
      $region21: #{tpu_custom_call.1} parent=5 // pred_check
        %p152 = pneg %p151
      $region22: #{tpu_custom_call.1} parent=5 // pred_check_branch
        %154 = sbr.rel (%p152) target = $region24
      $region23: #{tpu_custom_call.1} parent=5 // pred_region
        // Predicated region
        $region25: #{tpu_custom_call.1} parent=23 // pred_check
          %p155 = pneg %p36
        $region26: #{tpu_custom_call.1} parent=23 // pred_check_branch
          %157 = sbr.rel (%p155) target = $region28
        $region27: #{tpu_custom_call.1} parent=23 // pred_region
          %s158 = sand.u32 %s26, 1
          %s159 = scalar_lea.sflag [#allocation3], %s158
          %s160 = sand.u32 %s26, 1
          %s161 = smul.addr %s160, 8
          %s162 = scalar_lea.vmem [#allocation2], %s161
          %s164 = ssub.s32 128, 128
          %165 = vsyncadd %s159, %s164
          %s166 = smul.addr %s16, 128
          %s167 = scalar_lea.hbm %s0, %s166
          %s169 = sshll.u32 %s162, 4
          %s170 = int_to_ptr.vmem [resolvable:$true] %s169
          %172 = dma.hbm_to_vmem [thread:$0]  %s167, 128, %s170, %s159
        $region28: #{tpu_custom_call.1} parent=23 // pred_fallthru
          _
      $region24: #{tpu_custom_call.1} parent=5 // pred_fallthru
        _
      %p173 = scmp.le.s32.totalorder 1, %s16
      %p174 = scmp.lt.s32.totalorder %s16, 3
      %p175 = pnand %p173, %p174
      %p176 = pneg %p175
      // Predicated region
      $region29: #{tpu_custom_call.1} parent=5 // pred_check
        _
      $region30: #{tpu_custom_call.1} parent=5 // pred_check_branch
        %178 = sbr.rel (%p175) target = $region32
      $region31: #{tpu_custom_call.1} parent=5 // pred_region
        %s179 = ssub.s32 %s16, 1
        %s180 = sand.u32 %s29, 1
        %s181 = scalar_lea.sflag [#allocation3], %s180
        %s182 = sand.u32 %s29, 1
        %s183 = smul.addr %s182, 8
        %s184 = scalar_lea.vmem [#allocation2], %s183
        // Predicated region
        $region33: #{tpu_custom_call.1} parent=31 // pred_check
          %p185 = pneg %p42
        $region34: #{tpu_custom_call.1} parent=31 // pred_check_branch
          %187 = sbr.rel (%p185) target = $region36
        $region35: #{tpu_custom_call.1} parent=31 // pred_region
          %188 = dma.done %s181, 128
        $region36: #{tpu_custom_call.1} parent=31 // pred_fallthru
          _
        // Predicated region
        $region37: #{tpu_custom_call.1} parent=31 // pred_check
          %p189 = pneg %p63
        $region38: #{tpu_custom_call.1} parent=31 // pred_check_branch
          %191 = sbr.rel (%p189) target = $region40
        $region39: #{tpu_custom_call.1} parent=31 // pred_region
          %192 = dma.done [#allocation6], 8192
        $region40: #{tpu_custom_call.1} parent=31 // pred_fallthru
          _
        // Predicated region
        $region41: #{tpu_custom_call.1} parent=31 // pred_check
          %p193 = pneg %p84
        $region42: #{tpu_custom_call.1} parent=31 // pred_check_branch
          %195 = sbr.rel (%p193) target = $region44
        $region43: #{tpu_custom_call.1} parent=31 // pred_region
          %196 = dma.done [#allocation6], 4096
        $region44: #{tpu_custom_call.1} parent=31 // pred_fallthru
          _
        %s197 = sand.u32 %s29, 1
        %s198 = scalar_lea.sflag [#allocation3], %s197
        %s199 = sand.u32 %s29, 1
        %s200 = smul.addr %s199, 8
        %s201 = scalar_lea.vmem [#allocation2], %s200
        %p202 = pneg %p42
        %p203 = pneg %p39
        %p204 = pneg %p63
        %p205 = pneg %p60
        %p206 = pneg %p84
        %p207 = pneg %p81
        %p208 = pneg %p110
        %p209 = pneg %p107
        %s210 = sand.u32 %s97, 1
        %s211 = scalar_lea.sflag [#allocation4], %s210
        %s212 = sand.u32 %s97, 1
        %s213 = smul.addr %s212, 8
        %s214 = scalar_lea.vmem [#allocation8], %s213
        %v215 = vld [vmem:[%s184] sm:$0xff]
        %v216 = vld [vmem:[#allocation5] sm:$0xff]
        %v217 = vld [vmem:[#allocation5 + $0x8] sm:$0xff]
        %v218 = vld [vmem:[#allocation5 + $0x10] sm:$0xff]
        %v219 = vld [vmem:[#allocation5 + $0x18] sm:$0xff]
        %v220 = vld [vmem:[#allocation5 + $0x20] sm:$0xff]
        %v221 = vld [vmem:[#allocation5 + $0x28] sm:$0xff]
        %v222 = vld [vmem:[#allocation5 + $0x30] sm:$0xff]
        %v223 = vld [vmem:[#allocation5 + $0x38] sm:$0xff]
        %v224 = vld [vmem:[#allocation5 + $0x40] sm:$0xff]
        %v225 = vld [vmem:[#allocation5 + $0x48] sm:$0xff]
        %v226 = vld [vmem:[#allocation5 + $0x50] sm:$0xff]
        %v227 = vld [vmem:[#allocation5 + $0x58] sm:$0xff]
        %v228 = vld [vmem:[#allocation5 + $0x60] sm:$0xff]
        %v229 = vld [vmem:[#allocation5 + $0x68] sm:$0xff]
        %v230 = vld [vmem:[#allocation5 + $0x70] sm:$0xff]
        %v231 = vld [vmem:[#allocation5 + $0x78] sm:$0xff]
        %v232 = vld [vmem:[#allocation5 + $0x80] sm:$0xff]
        %v233 = vld [vmem:[#allocation5 + $0x88] sm:$0xff]
        %v234 = vld [vmem:[#allocation5 + $0x90] sm:$0xff]
        %v235 = vld [vmem:[#allocation5 + $0x98] sm:$0xff]
        %v236 = vld [vmem:[#allocation5 + $0xa0] sm:$0xff]
        %v237 = vld [vmem:[#allocation5 + $0xa8] sm:$0xff]
        %v238 = vld [vmem:[#allocation5 + $0xb0] sm:$0xff]
        %v239 = vld [vmem:[#allocation5 + $0xb8] sm:$0xff]
        %v240 = vld [vmem:[#allocation5 + $0xc0] sm:$0xff]
        %v241 = vld [vmem:[#allocation5 + $0xc8] sm:$0xff]
        %v242 = vld [vmem:[#allocation5 + $0xd0] sm:$0xff]
        %v243 = vld [vmem:[#allocation5 + $0xd8] sm:$0xff]
        %v244 = vld [vmem:[#allocation5 + $0xe0] sm:$0xff]
        %v245 = vld [vmem:[#allocation5 + $0xe8] sm:$0xff]
        %v246 = vld [vmem:[#allocation5 + $0xf0] sm:$0xff]
        %v247 = vld [vmem:[#allocation5 + $0xf8] sm:$0xff]
        %v248 = vld [vmem:[#allocation5 + $0x100] sm:$0xff]
        %v249 = vld [vmem:[#allocation5 + $0x108] sm:$0xff]
        %v250 = vld [vmem:[#allocation5 + $0x110] sm:$0xff]
        %v251 = vld [vmem:[#allocation5 + $0x118] sm:$0xff]
        %v252 = vld [vmem:[#allocation5 + $0x120] sm:$0xff]
        %v253 = vld [vmem:[#allocation5 + $0x128] sm:$0xff]
        %v254 = vld [vmem:[#allocation5 + $0x130] sm:$0xff]
        %v255 = vld [vmem:[#allocation5 + $0x138] sm:$0xff]
        %v256 = vld [vmem:[#allocation5 + $0x140] sm:$0xff]
        %v257 = vld [vmem:[#allocation5 + $0x148] sm:$0xff]
        %v258 = vld [vmem:[#allocation5 + $0x150] sm:$0xff]
        %v259 = vld [vmem:[#allocation5 + $0x158] sm:$0xff]
        %v260 = vld [vmem:[#allocation5 + $0x160] sm:$0xff]
        %v261 = vld [vmem:[#allocation5 + $0x168] sm:$0xff]
        %v262 = vld [vmem:[#allocation5 + $0x170] sm:$0xff]
        %v263 = vld [vmem:[#allocation5 + $0x178] sm:$0xff]
        %v264 = vld [vmem:[#allocation5 + $0x180] sm:$0xff]
        %v265 = vld [vmem:[#allocation5 + $0x188] sm:$0xff]
        %v266 = vld [vmem:[#allocation5 + $0x190] sm:$0xff]
        %v267 = vld [vmem:[#allocation5 + $0x198] sm:$0xff]
        %v268 = vld [vmem:[#allocation5 + $0x1a0] sm:$0xff]
        %v269 = vld [vmem:[#allocation5 + $0x1a8] sm:$0xff]
        %v270 = vld [vmem:[#allocation5 + $0x1b0] sm:$0xff]
        %v271 = vld [vmem:[#allocation5 + $0x1b8] sm:$0xff]
        %v272 = vld [vmem:[#allocation5 + $0x1c0] sm:$0xff]
        %v273 = vld [vmem:[#allocation5 + $0x1c8] sm:$0xff]
        %v274 = vld [vmem:[#allocation5 + $0x1d0] sm:$0xff]
        %v275 = vld [vmem:[#allocation5 + $0x1d8] sm:$0xff]
        %v276 = vld [vmem:[#allocation5 + $0x1e0] sm:$0xff]
        %v277 = vld [vmem:[#allocation5 + $0x1e8] sm:$0xff]
        %v278 = vld [vmem:[#allocation5 + $0x1f0] sm:$0xff]
        %v279 = vld [vmem:[#allocation5 + $0x1f8] sm:$0xff]
        %280 = vmatprep.subr.mxu0 %v277
        %281 = vmatpush1.msra.mxu0 %v276
        %282 = vmatprep.subr.mxu0 %v273
        %283 = vmatpush1.msra.mxu0 %v272
        %284 = vmatprep.subr.mxu0 %v269
        %285 = vmatpush1.msra.mxu0 %v268
        %286 = vmatprep.subr.mxu0 %v265
        %287 = vmatpush1.msra.mxu0 %v264
        %288 = vmatprep.subr.mxu0 %v261
        %289 = vmatpush1.msra.mxu0 %v260
        %290 = vmatprep.subr.mxu0 %v257
        %291 = vmatpush1.msra.mxu0 %v256
        %292 = vmatprep.subr.mxu0 %v253
        %293 = vmatpush1.msra.mxu0 %v252
        %294 = vmatprep.subr.mxu0 %v249
        %295 = vmatpush1.msra.mxu0 %v248
        %296 = vmatprep.subr.mxu0 %v245
        %297 = vmatpush1.msra.mxu0 %v244
        %298 = vmatprep.subr.mxu0 %v241
        %299 = vmatpush1.msra.mxu0 %v240
        %300 = vmatprep.subr.mxu0 %v237
        %301 = vmatpush1.msra.mxu0 %v236
        %302 = vmatprep.subr.mxu0 %v233
        %303 = vmatpush1.msra.mxu0 %v232
        %304 = vmatprep.subr.mxu0 %v229
        %305 = vmatpush1.msra.mxu0 %v228
        %306 = vmatprep.subr.mxu0 %v225
        %307 = vmatpush1.msra.mxu0 %v224
        %308 = vmatprep.subr.mxu0 %v221
        %309 = vmatpush1.msra.mxu0 %v220
        %310 = vmatprep.subr.mxu0 %v217
        %311 = vmatpush1.msra.mxu0 %v216
        %312 = vmatprep.subr.mxu0 0.0
        %313 = vmatpush2.msra.mxu0 0.0
        %314 = vmatprep.subr.mxu0 0.0
        %315 = vmatpush2.msra.mxu0 0.0
        %316 = vmatprep.subr.mxu0 0.0
        %317 = vmatpush2.msra.mxu0 0.0
        %318 = vmatprep.subr.mxu0 0.0
        %319 = vmatpush2.msra.mxu0 0.0
        %320 = vmatprep.subr.mxu0 0.0
        %321 = vmatpush2.msra.mxu0 0.0
        %322 = vmatprep.subr.mxu0 0.0
        %323 = vmatpush2.msra.mxu0 0.0
        %324 = vmatprep.subr.mxu0 0.0
        %325 = vmatpush2.msra.mxu0 0.0
        %326 = vmatprep.subr.mxu0 0.0
        %327 = vmatpush2.msra.mxu0 0.0
        %328 = vmatprep.subr.mxu0 0.0
        %329 = vmatpush2.msra.mxu0 0.0
        %330 = vmatprep.subr.mxu0 0.0
        %331 = vmatpush2.msra.mxu0 0.0
        %332 = vmatprep.subr.mxu0 0.0
        %333 = vmatpush2.msra.mxu0 0.0
        %334 = vmatprep.subr.mxu0 0.0
        %335 = vmatpush2.msra.mxu0 0.0
        %336 = vmatprep.subr.mxu0 0.0
        %337 = vmatpush2.msra.mxu0 0.0
        %338 = vmatprep.subr.mxu0 0.0
        %339 = vmatpush2.msra.mxu0 0.0
        %340 = vmatprep.subr.mxu0 0.0
        %341 = vmatpush2.msra.mxu0 0.0
        %342 = vmatprep.subr.mxu0 0.0
        %343 = vmatpush2.msra.mxu0 0.0
        %344 = vmatprep.mubr.f32.mxu0 0.0
        %345 = vmatmul.mubr.f32.gmra.mxu0 %v215
        %v346 = vpop.f32.mrf.mxu0
        %v347 = vadd.f32 0.0, %v346
        %v348 = vpop.f32.mrf.mxu0
        %v349 = vadd.f32 0.0, %v348
        %350 = vdwg.mxu0
        %351 = vmatprep.subr.mxu0 %v279
        %352 = vmatpush1.msra.mxu0 %v278
        %353 = vmatprep.subr.mxu0 %v275
        %354 = vmatpush1.msra.mxu0 %v274
        %355 = vmatprep.subr.mxu0 %v271
        %356 = vmatpush1.msra.mxu0 %v270
        %357 = vmatprep.subr.mxu0 %v267
        %358 = vmatpush1.msra.mxu0 %v266
        %359 = vmatprep.subr.mxu0 %v263
        %360 = vmatpush1.msra.mxu0 %v262
        %361 = vmatprep.subr.mxu0 %v259
        %362 = vmatpush1.msra.mxu0 %v258
        %363 = vmatprep.subr.mxu0 %v255
        %364 = vmatpush1.msra.mxu0 %v254
        %365 = vmatprep.subr.mxu0 %v251
        %366 = vmatpush1.msra.mxu0 %v250
        %367 = vmatprep.subr.mxu0 %v247
        %368 = vmatpush1.msra.mxu0 %v246
        %369 = vmatprep.subr.mxu0 %v243
        %370 = vmatpush1.msra.mxu0 %v242
        %371 = vmatprep.subr.mxu0 %v239
        %372 = vmatpush1.msra.mxu0 %v238
        %373 = vmatprep.subr.mxu0 %v235
        %374 = vmatpush1.msra.mxu0 %v234
        %375 = vmatprep.subr.mxu0 %v231
        %376 = vmatpush1.msra.mxu0 %v230
        %377 = vmatprep.subr.mxu0 %v227
        %378 = vmatpush1.msra.mxu0 %v226
        %379 = vmatprep.subr.mxu0 %v223
        %380 = vmatpush1.msra.mxu0 %v222
        %381 = vmatprep.subr.mxu0 %v219
        %382 = vmatpush1.msra.mxu0 %v218
        %383 = vmatprep.subr.mxu0 0.0
        %384 = vmatpush2.msra.mxu0 0.0
        %385 = vmatprep.subr.mxu0 0.0
        %386 = vmatpush2.msra.mxu0 0.0
        %387 = vmatprep.subr.mxu0 0.0
        %388 = vmatpush2.msra.mxu0 0.0
        %389 = vmatprep.subr.mxu0 0.0
        %390 = vmatpush2.msra.mxu0 0.0
        %391 = vmatprep.subr.mxu0 0.0
        %392 = vmatpush2.msra.mxu0 0.0
        %393 = vmatprep.subr.mxu0 0.0
        %394 = vmatpush2.msra.mxu0 0.0
        %395 = vmatprep.subr.mxu0 0.0
        %396 = vmatpush2.msra.mxu0 0.0
        %397 = vmatprep.subr.mxu0 0.0
        %398 = vmatpush2.msra.mxu0 0.0
        %399 = vmatprep.subr.mxu0 0.0
        %400 = vmatpush2.msra.mxu0 0.0
        %401 = vmatprep.subr.mxu0 0.0
        %402 = vmatpush2.msra.mxu0 0.0
        %403 = vmatprep.subr.mxu0 0.0
        %404 = vmatpush2.msra.mxu0 0.0
        %405 = vmatprep.subr.mxu0 0.0
        %406 = vmatpush2.msra.mxu0 0.0
        %407 = vmatprep.subr.mxu0 0.0
        %408 = vmatpush2.msra.mxu0 0.0
        %409 = vmatprep.subr.mxu0 0.0
        %410 = vmatpush2.msra.mxu0 0.0
        %411 = vmatprep.subr.mxu0 0.0
        %412 = vmatpush2.msra.mxu0 0.0
        %413 = vmatprep.subr.mxu0 0.0
        %414 = vmatpush2.msra.mxu0 0.0
        %415 = vmatprep.mubr.f32.mxu0 0.0
        %416 = vmatmul.mubr.f32.gmra.mxu0 %v215
        %v417 = vpop.f32.mrf.mxu0
        %v418 = vadd.f32 0.0, %v417
        %v419 = vpop.f32.mrf.mxu0
        %v420 = vadd.f32 0.0, %v419
        %421 = vdwg.mxu0
        %v422 = vmul.f32 %v347, %v347
        %v423 = vmul.f32 %v349, %v349
        %v424 = vmul.f32 %v347, %v422
        %v425 = vmul.f32 %v349, %v423
        %v426 = vmul.f32 %v424, 0.044715
        %v427 = vmul.f32 %v425, 0.044715
        %v428 = vadd.f32 %v347, %v426
        %v429 = vadd.f32 %v349, %v427
        %v430 = vmul.f32 %v428, 0.7978846
        %v431 = vmul.f32 %v429, 0.7978846
        %v432 = vtanh.pop %v430
        %v433 = vtanh.pop %v431
        %v434 = vadd.f32 %v432, 1.0
        %v435 = vadd.f32 %v433, 1.0
        %v436 = vmul.f32 %v434, 0.5
        %v437 = vmul.f32 %v435, 0.5
        %v438 = vmul.f32 %v347, %v436
        %v439 = vmul.f32 %v349, %v437
        %v440 = vmul.f32 %v438, %v418
        %v441 = vmul.f32 %v439, %v420
        %v442 = vld [vmem:[#allocation7] sm:$0xff]
        %v443 = vld [vmem:[#allocation7 + $0x8] sm:$0xff]
        %v444 = vld [vmem:[#allocation7 + $0x10] sm:$0xff]
        %v445 = vld [vmem:[#allocation7 + $0x18] sm:$0xff]
        %v446 = vld [vmem:[#allocation7 + $0x20] sm:$0xff]
        %v447 = vld [vmem:[#allocation7 + $0x28] sm:$0xff]
        %v448 = vld [vmem:[#allocation7 + $0x30] sm:$0xff]
        %v449 = vld [vmem:[#allocation7 + $0x38] sm:$0xff]
        %v450 = vld [vmem:[#allocation7 + $0x40] sm:$0xff]
        %v451 = vld [vmem:[#allocation7 + $0x48] sm:$0xff]
        %v452 = vld [vmem:[#allocation7 + $0x50] sm:$0xff]
        %v453 = vld [vmem:[#allocation7 + $0x58] sm:$0xff]
        %v454 = vld [vmem:[#allocation7 + $0x60] sm:$0xff]
        %v455 = vld [vmem:[#allocation7 + $0x68] sm:$0xff]
        %v456 = vld [vmem:[#allocation7 + $0x70] sm:$0xff]
        %v457 = vld [vmem:[#allocation7 + $0x78] sm:$0xff]
        %v458 = vld [vmem:[#allocation7 + $0x80] sm:$0xff]
        %v459 = vld [vmem:[#allocation7 + $0x88] sm:$0xff]
        %v460 = vld [vmem:[#allocation7 + $0x90] sm:$0xff]
        %v461 = vld [vmem:[#allocation7 + $0x98] sm:$0xff]
        %v462 = vld [vmem:[#allocation7 + $0xa0] sm:$0xff]
        %v463 = vld [vmem:[#allocation7 + $0xa8] sm:$0xff]
        %v464 = vld [vmem:[#allocation7 + $0xb0] sm:$0xff]
        %v465 = vld [vmem:[#allocation7 + $0xb8] sm:$0xff]
        %v466 = vld [vmem:[#allocation7 + $0xc0] sm:$0xff]
        %v467 = vld [vmem:[#allocation7 + $0xc8] sm:$0xff]
        %v468 = vld [vmem:[#allocation7 + $0xd0] sm:$0xff]
        %v469 = vld [vmem:[#allocation7 + $0xd8] sm:$0xff]
        %v470 = vld [vmem:[#allocation7 + $0xe0] sm:$0xff]
        %v471 = vld [vmem:[#allocation7 + $0xe8] sm:$0xff]
        %v472 = vld [vmem:[#allocation7 + $0xf0] sm:$0xff]
        %v473 = vld [vmem:[#allocation7 + $0xf8] sm:$0xff]
        %474 = vmatprep.subr.mxu0 0.0
        %475 = vmatpush1.msra.mxu0 %v457
        %476 = vmatprep.subr.mxu0 0.0
        %477 = vmatpush1.msra.mxu0 %v456
        %478 = vmatprep.subr.mxu0 0.0
        %479 = vmatpush1.msra.mxu0 %v455
        %480 = vmatprep.subr.mxu0 0.0
        %481 = vmatpush1.msra.mxu0 %v454
        %482 = vmatprep.subr.mxu0 0.0
        %483 = vmatpush1.msra.mxu0 %v453
        %484 = vmatprep.subr.mxu0 0.0
        %485 = vmatpush1.msra.mxu0 %v452
        %486 = vmatprep.subr.mxu0 0.0
        %487 = vmatpush1.msra.mxu0 %v451
        %488 = vmatprep.subr.mxu0 0.0
        %489 = vmatpush1.msra.mxu0 %v450
        %490 = vmatprep.subr.mxu0 0.0
        %491 = vmatpush1.msra.mxu0 %v449
        %492 = vmatprep.subr.mxu0 0.0
        %493 = vmatpush1.msra.mxu0 %v448
        %494 = vmatprep.subr.mxu0 0.0
        %495 = vmatpush1.msra.mxu0 %v447
        %496 = vmatprep.subr.mxu0 0.0
        %497 = vmatpush1.msra.mxu0 %v446
        %498 = vmatprep.subr.mxu0 0.0
        %499 = vmatpush1.msra.mxu0 %v445
        %500 = vmatprep.subr.mxu0 0.0
        %501 = vmatpush1.msra.mxu0 %v444
        %502 = vmatprep.subr.mxu0 0.0
        %503 = vmatpush1.msra.mxu0 %v443
        %504 = vmatprep.subr.mxu0 0.0
        %505 = vmatpush1.msra.mxu0 %v442
        %506 = vmatprep.subr.mxu0 0.0
        %507 = vmatpush2.msra.mxu0 %v473
        %508 = vmatprep.subr.mxu0 0.0
        %509 = vmatpush2.msra.mxu0 %v472
        %510 = vmatprep.subr.mxu0 0.0
        %511 = vmatpush2.msra.mxu0 %v471
        %512 = vmatprep.subr.mxu0 0.0
        %513 = vmatpush2.msra.mxu0 %v470
        %514 = vmatprep.subr.mxu0 0.0
        %515 = vmatpush2.msra.mxu0 %v469
        %516 = vmatprep.subr.mxu0 0.0
        %517 = vmatpush2.msra.mxu0 %v468
        %518 = vmatprep.subr.mxu0 0.0
        %519 = vmatpush2.msra.mxu0 %v467
        %520 = vmatprep.subr.mxu0 0.0
        %521 = vmatpush2.msra.mxu0 %v466
        %522 = vmatprep.subr.mxu0 0.0
        %523 = vmatpush2.msra.mxu0 %v465
        %524 = vmatprep.subr.mxu0 0.0
        %525 = vmatpush2.msra.mxu0 %v464
        %526 = vmatprep.subr.mxu0 0.0
        %527 = vmatpush2.msra.mxu0 %v463
        %528 = vmatprep.subr.mxu0 0.0
        %529 = vmatpush2.msra.mxu0 %v462
        %530 = vmatprep.subr.mxu0 0.0
        %531 = vmatpush2.msra.mxu0 %v461
        %532 = vmatprep.subr.mxu0 0.0
        %533 = vmatpush2.msra.mxu0 %v460
        %534 = vmatprep.subr.mxu0 0.0
        %535 = vmatpush2.msra.mxu0 %v459
        %536 = vmatprep.subr.mxu0 0.0
        %537 = vmatpush2.msra.mxu0 %v458
        %538 = vmatprep.mubr.f32.mxu0 %v441
        %539 = vmatmul.mubr.f32.gmra.mxu0 %v440
        %v540 = vpop.f32.mrf.mxu0
        %v541 = vadd.f32 0.0, %v540
        %v542 = vpop.f32.mrf.mxu0
        %543 = vdwg.mxu0
        %544 = vst [vmem:[%s214] sm:$0xff] %v541
        %s545 = sand.u32 %s97, 1
        %s546 = scalar_lea.sflag [#allocation4], %s545
        %s547 = sand.u32 %s97, 1
        %s548 = smul.addr %s547, 8
        %s549 = scalar_lea.vmem [#allocation8], %s548
        // Predicated region
        $region45: #{tpu_custom_call.1} parent=31 // pred_check
          %p550 = pneg %p107
        $region46: #{tpu_custom_call.1} parent=31 // pred_check_branch
          %552 = sbr.rel (%p550) target = $region48
        $region47: #{tpu_custom_call.1} parent=31 // pred_region
          %s554 = ssub.s32 128, 128
          %555 = vsyncadd %s546, %s554
          %s556 = smul.addr %s21, 128
          %s557 = scalar_lea.hbm %s3, %s556
          %s559 = sshll.u32 %s549, 4
          %s560 = int_to_ptr.vmem [resolvable:$true] %s559
          %562 = dma.vmem_to_hbm [thread:$0]  %s560, 128, %s557, %s546
        $region48: #{tpu_custom_call.1} parent=31 // pred_fallthru
          _
      $region32: #{tpu_custom_call.1} parent=5 // pred_fallthru
        _
      %p563 = scmp.le.s32.totalorder 2, %s16
      // Predicated region
      $region49: #{tpu_custom_call.1} parent=5 // pred_check
        %p564 = pneg %p563
      $region50: #{tpu_custom_call.1} parent=5 // pred_check_branch
        %566 = sbr.rel (%p564) target = $region52
      $region51: #{tpu_custom_call.1} parent=5 // pred_region
        %s567 = ssub.s32 %s16, 2
        // Predicated region
        $region53: #{tpu_custom_call.1} parent=51 // pred_check
          %p568 = pneg %p113
        $region54: #{tpu_custom_call.1} parent=51 // pred_check_branch
          %570 = sbr.rel (%p568) target = $region56
        $region55: #{tpu_custom_call.1} parent=51 // pred_region
          %s571 = sand.u32 %s98, 1
          %s572 = scalar_lea.sflag [#allocation4], %s571
          %s573 = sand.u32 %s98, 1
          %s574 = smul.addr %s573, 8
          %s575 = scalar_lea.vmem [#allocation8], %s574
          %576 = dma.done %s572, 128
        $region56: #{tpu_custom_call.1} parent=51 // pred_fallthru
          _
      $region52: #{tpu_custom_call.1} parent=5 // pred_fallthru
        _
    $region6: #{tpu_custom_call.1} parent=1 // loop_footer
      %s20 = sadd.s32 1, %s16
    $region7: #{tpu_custom_call.1} parent=1 // loop_footer_branch
      %15 = sbr.rel target = $region3
    $region8: #{tpu_custom_call.1} parent=1 // loop_exit
      _
    %577 = vsyncpa [#allocation3], 1
    %s578 = scalar_lea.sflag [#allocation3], 1
    %579 = vsyncpa %s578, 1
    %580 = vsyncpa [#allocation6], 1
    %581 = vsyncpa [#allocation4], 1
    %s582 = scalar_lea.sflag [#allocation4], 1
    %583 = vsyncpa %s582, 1

</llo_original>
